<compile_context>
chip_gen: v7x
topology: tpu7x:2x2x1
jax: 0.10.0
libtpu: 0.0.40
codegen_flags: <defaults>
</compile_context>

<pallas_src>
import math
import functools

import jax
import jax.numpy as jnp
from jax.experimental import pallas as pl
from jax.experimental.pallas import tpu as pltpu


N_HEAD = 2
D_MODEL = 32


# ---------------------------------------------------------------------------
# Kernel: full RaggedAttention forward for a block of `bblk` sequences.
# ---------------------------------------------------------------------------
def _attention_kernel(x_ref, wqkv_ref, bq_ref, wp_ref, bp_ref, o_ref, *,
                      n_head, bblk, nseq):
    C = o_ref.shape[-1]
    dh = C // n_head
    M = bblk * nseq

    x = x_ref[...]                                       # (M, C) bf16 (or f32)

    # Fused Q|K|V projection: one (M, C) @ (C, 3C) GEMM with f32 accumulation.
    qkv = jnp.dot(x, wqkv_ref[...], preferred_element_type=jnp.float32)

    # 1/sqrt(dh) is already folded into the q columns of W_qkv and into bq;
    # the k bias is dropped (softmax-invariant without mask/relpos) and the
    # v bias is folded into bp host-side.
    q = (qkv[:, :C] + bq_ref[...]).reshape(bblk, nseq, C)
    k = qkv[:, C:2 * C].reshape(bblk, nseq, C)
    v = qkv[:, 2 * C:].reshape(bblk, nseq, C)

    ys = []
    for h in range(n_head):                              # static unroll (n_head = 2)
        sl = slice(h * dh, (h + 1) * dh)
        att = jnp.einsum('bqd,bkd->bqk', q[:, :, sl], k[:, :, sl],
                         preferred_element_type=jnp.float32)
        # visible is None / padpack is None -> no attention mask.
        att = att - jnp.max(att, axis=-1, keepdims=True)
        p = jnp.exp(att)
        # approx reciprocal (EUP slot): ~2^-12 relative error in the softmax
        # normalization -- well inside the 1e-3 tolerance used here.
        p = p * pl.reciprocal(jnp.sum(p, axis=-1, keepdims=True), approx=True)
        # attn_drop is identity (attn_pdrop = 0.0)
        ys.append(jnp.einsum('bqk,bkd->bqd', p, v[:, :, sl],
                             preferred_element_type=jnp.float32))

    # Head concat -> single K=C output projection (one MXU dispatch, no VPU add
    # of partial projections).
    y = jnp.concatenate(ys, axis=-1).reshape(M, C)
    out = jnp.dot(y.astype(wp_ref.dtype), wp_ref[...],
                  preferred_element_type=jnp.float32) + bp_ref[...]
    # resid_drop is identity (resid_pdrop = 0.0)
    o_ref[...] = out.astype(o_ref.dtype)


# ---------------------------------------------------------------------------
# Block-size picker
# ---------------------------------------------------------------------------
def _pick_bblk(nbatch, nseq, target_rows=8192):
    """Pick how many sequences to process per grid step.

    Largest divisor of nbatch whose block (bblk*nseq rows) stays <= target_rows,
    subject to the (8,128) sublane rule (bblk*nseq % 8 == 0 unless the block is
    the full array).  If the grid would collapse to a single step, prefer >= 2
    steps when that still leaves big blocks so the 'parallel' axis can be
    sharded across the two TensorCores of a v7x chip (harmless 1-TC chips).
    """
    divisors = [d for d in range(1, nbatch + 1) if nbatch % d == 0]

    def legal(d):
        return d == nbatch or (d * nseq) % 8 == 0

    fit = [d for d in divisors if legal(d) and d * nseq <= target_rows]
    if fit:
        bblk = max(fit)
    else:
        bblk = min(d for d in divisors if legal(d))

    if nbatch // bblk == 1:
        # TODO(synk): gate on pltpu.get_tpu_info() core count once stable; for
        # now only split when each half-block is still >= target_rows/2 rows.
        halves = [d for d in divisors
                  if legal(d) and nbatch // d >= 2 and d * nseq >= target_rows // 2]
        if halves:
            bblk = max(halves)
    return bblk


# ---------------------------------------------------------------------------
# pallas_call builder (cached: built once per static configuration)
# ---------------------------------------------------------------------------
@functools.lru_cache(maxsize=None)
def _build_call(nbatch, nseq, d_model, n_head, bblk, x_itemsize):
    C = d_model
    M = bblk * nseq
    N = nbatch * nseq
    grid = (nbatch // bblk,)

    def const(shape):                                   # weights stay VMEM-resident
        return pl.BlockSpec(shape, lambda b: (0, 0))

    in_specs = [
        pl.BlockSpec((M, C), lambda b: (b, 0)),         # x slab (bblk sequences)
        const((C, 3 * C)),                              # fused W_qkv
        const((1, C)),                                  # bq (scale folded in)
        const((C, C)),                                  # wp
        const((1, C)),                                  # bp (+ bv @ wp folded in)
    ]
    out_specs = pl.BlockSpec((M, C), lambda b: (b, 0))

    # Generous per-step VMEM estimate: double-buffered x + out blocks plus
    # in-kernel f32 temporaries (qkv, q/k/v, scores, y).  Clamped so the
    # explicit limit is legal on every generation (v5e default scoped VMEM is
    # 16 MiB; v7x physical VMEM is 64 MiB).
    est = M * C * (2 * x_itemsize + 2 * 4 + 16 * 4)
    vmem_limit = int(min(max(2 * est, 16 << 20), 48 << 20))

    return pl.pallas_call(
        functools.partial(_attention_kernel, n_head=n_head, bblk=bblk, nseq=nseq),
        out_shape=jax.ShapeDtypeStruct((N, C), jnp.float32),
        grid_spec=pltpu.PrefetchScalarGridSpec(
            num_scalar_prefetch=0,
            grid=grid,
            in_specs=in_specs,
            out_specs=out_specs,
        ),
        compiler_params=pltpu.CompilerParams(
            dimension_semantics=("parallel",),
            vmem_limit_bytes=vmem_limit,
        ),
    )


# ---------------------------------------------------------------------------
# Forward (padpack() is None path of RaggedAttention.forward)
# ---------------------------------------------------------------------------
@functools.partial(jax.jit,
                   static_argnames=("nbatch", "nseq", "n_head", "target_rows"))
def ragged_attention_forward(x_flat, batch_index, prepared, *, nbatch, nseq,
                             n_head=N_HEAD, target_rows=8192):
    N, C = x_flat.shape
    assert C % n_head == 0
    assert N == nbatch * nseq and nseq > 0, (N, nbatch, nseq)
    # TODO(synk): nseq == 0 degenerate case of the reference module is not handled.

    bblk = _pick_bblk(nbatch, nseq, target_rows)
    x = x_flat.astype(prepared["w_qkv"].dtype)          # bf16 on the MXU path
    call = _build_call(nbatch, nseq, C, n_head, bblk,
                       jnp.dtype(prepared["w_qkv"].dtype).itemsize)
    out = call(x, prepared["w_qkv"], prepared["bq"], prepared["wp"], prepared["bp"])
    return out.reshape(batch_index.shape[0], C)


# ---------------------------------------------------------------------------
# Parameters (Linear weights stored transposed: (in, out) so kernel does x @ W)
# ---------------------------------------------------------------------------
def init_params(key, d_model=D_MODEL):
    ks = jax.random.split(key, 8)

    def lin(k, fi, fo, scale=0.02):
        return scale * jax.random.normal(k, (fi, fo), dtype=jnp.float32)

    return {
        "wq": lin(ks[0], d_model, d_model), "bq": lin(ks[1], 1, d_model),
        "wk": lin(ks[2], d_model, d_model), "bk": lin(ks[3], 1, d_model),
        "wv": lin(ks[4], d_model, d_model), "bv": lin(ks[5], 1, d_model),
        "wp": lin(ks[6], d_model, d_model), "bp": lin(ks[7], 1, d_model),
    }


def prepare_params(params, *, n_head=N_HEAD, use_bf16=True):
    """One-time host-side parameter prep: QKV fusion, constant folds, bf16 cast.

    - wq / bq are pre-scaled by 1/sqrt(dh) (drops the per-score multiply),
    - bk is dropped (per-query constant shift is softmax-invariant: no mask/relpos),
    - bv @ wp is folded into bp (softmax rows sum to 1),
    - matmul weights stored in bf16 (f32 accumulation in-kernel); biases stay f32.
    """
    C = params["wq"].shape[0]
    dh = C // n_head
    scale = 1.0 / math.sqrt(dh)
    w_dtype = jnp.bfloat16 if use_bf16 else jnp.float32
    w_qkv = jnp.concatenate(
        [params["wq"] * scale, params["wk"], params["wv"]], axis=1).astype(w_dtype)
    return {
        "w_qkv": w_qkv,
        "bq": (params["bq"] * scale).astype(jnp.float32),
        "wp": params["wp"].astype(w_dtype),
        "bp": (params["bp"] + params["bv"] @ params["wp"]).astype(jnp.float32),
    }


# ---------------------------------------------------------------------------
# Pure-JAX reference (mirrors the PyTorch forward for the padpack-None path)
# ---------------------------------------------------------------------------
def _reference(x_flat, params, nbatch, nseq, n_head=N_HEAD):
    C = x_flat.shape[-1]
    dh = C // n_head
    x = x_flat.reshape(nbatch, nseq, C)

    def lin(z, w, b):
        return z @ w + b

    def split_heads(z):  # (B,T,C) -> (B,H,T,dh)
        return z.reshape(nbatch, nseq, n_head, dh).transpose(0, 2, 1, 3)

    q = split_heads(lin(x, params["wq"], params["bq"]))
    k = split_heads(lin(x, params["wk"], params["bk"]))
    v = split_heads(lin(x, params["wv"], params["bv"]))

    att = (q @ jnp.swapaxes(k, -2, -1)) * (1.0 / math.sqrt(dh))
    att = jax.nn.softmax(att, axis=-1)
    y = att @ v
    y = y.transpose(0, 2, 1, 3).reshape(nbatch, nseq, C)
    y = lin(y, params["wp"], params["bp"])
    return y.reshape(nbatch * nseq, C)


# ---------------------------------------------------------------------------
if __name__ == "__main__":
    B, T, C = 2, 8, D_MODEL
    key = jax.random.PRNGKey(0)
    k_x, k_p = jax.random.split(key)

    x_flat = jax.random.normal(k_x, (B * T, C), dtype=jnp.float32)
    batch_index = jnp.repeat(jnp.arange(B, dtype=jnp.int32), T)
    params = init_params(k_p)
    prepared = prepare_params(params)

    out = ragged_attention_forward(x_flat, batch_index, prepared, nbatch=B, nseq=T)
    out = jax.block_until_ready(out)
    assert out.shape == (B * T, C), out.shape

    ref = _reference(x_flat, params, B, T)
    err = float(jnp.max(jnp.abs(out - ref)))
    assert err < 1e-3, f"max abs error vs reference: {err}"

    # Multi-grid-step sanity check (exercises the (b, 0) index maps with >1 step).
    B2 = 64
    x2 = jax.random.normal(jax.random.PRNGKey(1), (B2 * T, C), dtype=jnp.float32)
    bi2 = jnp.repeat(jnp.arange(B2, dtype=jnp.int32), T)
    out2 = jax.block_until_ready(
        ragged_attention_forward(x2, bi2, prepared, nbatch=B2, nseq=T,
                                 target_rows=256))
    ref2 = _reference(x2, params, B2, T)
    err2 = float(jnp.max(jnp.abs(out2 - ref2)))
    assert err2 < 1e-3, f"multi-step max abs error vs reference: {err2}"

    print("KERNEL_OK")
</pallas_src>

<mosaic_0001>
module attributes {stable_mosaic.version = 11 : i64} {
  func.func @_attention_kernel(%arg0: i32, %arg1: memref<16x32xbf16, #tpu.memory_space<vmem>>, %arg2: memref<32x96xbf16, #tpu.memory_space<vmem>>, %arg3: memref<1x32xf32, #tpu.memory_space<vmem>>, %arg4: memref<32x32xbf16, #tpu.memory_space<vmem>>, %arg5: memref<1x32xf32, #tpu.memory_space<vmem>>, %arg6: memref<16x32xf32, #tpu.memory_space<vmem>>) attributes {dimension_semantics = [#tpu.dimension_semantics<parallel>], iteration_bounds = array<i64: 1>, scalar_prefetch = 0 : i64, scratch_operands = 0 : i64, tpu.core_type = #tpu.core_type<tc>, window_params = [{transform_indices = @transform_0, window_bounds = array<i64: 16, 32>}, {pipeline_mode = #tpu.pipeline_mode<synchronous>, transform_indices = @transform_1, window_bounds = array<i64: 32, 96>}, {pipeline_mode = #tpu.pipeline_mode<synchronous>, transform_indices = @transform_2, window_bounds = array<i64: 1, 32>}, {pipeline_mode = #tpu.pipeline_mode<synchronous>, transform_indices = @transform_3, window_bounds = array<i64: 32, 32>}, {pipeline_mode = #tpu.pipeline_mode<synchronous>, transform_indices = @transform_4, window_bounds = array<i64: 1, 32>}, {transform_indices = @transform_5, window_bounds = array<i64: 16, 32>}]} {
    %c0 = arith.constant 0 : index
    %c0_0 = arith.constant 0 : index
    %0 = vector.load %arg1[%c0, %c0_0] : memref<16x32xbf16, #tpu.memory_space<vmem>>, vector<16x32xbf16>
    %c0_1 = arith.constant 0 : index
    %c0_2 = arith.constant 0 : index
    %1 = vector.load %arg2[%c0_1, %c0_2] : memref<32x96xbf16, #tpu.memory_space<vmem>>, vector<32x96xbf16>
    %cst = arith.constant dense<0.000000e+00> : vector<16x96xf32>
    %2 = tpu.matmul %0, %1, %cst {dimension_numbers = #tpu.dot_dimension_numbers<[1], [0], [0], [1], [0, 0, 1, 1], [], []>} : vector<16x32xbf16>, vector<32x96xbf16>, vector<16x96xf32> -> vector<16x96xf32>
    %3 = vector.extract_strided_slice %2 {offsets = [0, 0], sizes = [16, 32], strides = [1, 1]} : vector<16x96xf32> to vector<16x32xf32>
    %c0_3 = arith.constant 0 : index
    %c0_4 = arith.constant 0 : index
    %4 = vector.load %arg3[%c0_3, %c0_4] : memref<1x32xf32, #tpu.memory_space<vmem>>, vector<1x32xf32>
    %5 = vector.broadcast %4 : vector<1x32xf32> to vector<16x32xf32>
    %6 = arith.addf %3, %5 : vector<16x32xf32>
    %7 = vector.shape_cast %6 : vector<16x32xf32> to vector<2x8x32xf32>
    %8 = vector.extract_strided_slice %2 {offsets = [0, 32], sizes = [16, 32], strides = [1, 1]} : vector<16x96xf32> to vector<16x32xf32>
    %9 = vector.shape_cast %8 : vector<16x32xf32> to vector<2x8x32xf32>
    %10 = vector.extract_strided_slice %2 {offsets = [0, 64], sizes = [16, 32], strides = [1, 1]} : vector<16x96xf32> to vector<16x32xf32>
    %11 = vector.shape_cast %10 : vector<16x32xf32> to vector<2x8x32xf32>
    %12 = vector.extract_strided_slice %7 {offsets = [0, 0, 0], sizes = [2, 8, 16], strides = [1, 1, 1]} : vector<2x8x32xf32> to vector<2x8x16xf32>
    %13 = vector.extract_strided_slice %9 {offsets = [0, 0, 0], sizes = [2, 8, 16], strides = [1, 1, 1]} : vector<2x8x32xf32> to vector<2x8x16xf32>
    "tpu.trace_start"() <{level = 10 : i32, message = "bqd,bkd->bqk"}> : () -> ()
    %cst_5 = arith.constant dense<0.000000e+00> : vector<2x8x8xf32>
    %14 = tpu.matmul %12, %13, %cst_5 {dimension_numbers = #tpu.dot_dimension_numbers<[2], [2], [1], [1], [0, 0, 0, 1, 1, 1], [0], [0]>} : vector<2x8x16xf32>, vector<2x8x16xf32>, vector<2x8x8xf32> -> vector<2x8x8xf32>
    "tpu.trace_stop"() : () -> ()
    %cst_6 = arith.constant dense<0xFF800000> : vector<2x8xf32>
    %15 = vector.multi_reduction <maximumf>, %14, %cst_6 [2] : vector<2x8x8xf32> to vector<2x8xf32>
    %16 = vector.shape_cast %15 : vector<2x8xf32> to vector<2x8x1xf32>
    %17 = vector.broadcast %16 : vector<2x8x1xf32> to vector<2x8x8xf32>
    %18 = arith.subf %14, %17 : vector<2x8x8xf32>
    %19 = math.exp %18 : vector<2x8x8xf32>
    %cst_7 = arith.constant dense<0.000000e+00> : vector<2x8xf32>
    %20 = vector.multi_reduction <add>, %19, %cst_7 [2] : vector<2x8x8xf32> to vector<2x8xf32>
    %21 = vector.shape_cast %20 : vector<2x8xf32> to vector<2x8x1xf32>
    %22 = tpu.reciprocal %21 {approx = true} : vector<2x8x1xf32> -> vector<2x8x1xf32>
    %23 = vector.broadcast %22 : vector<2x8x1xf32> to vector<2x8x8xf32>
    %24 = arith.mulf %19, %23 : vector<2x8x8xf32>
    %25 = vector.extract_strided_slice %11 {offsets = [0, 0, 0], sizes = [2, 8, 16], strides = [1, 1, 1]} : vector<2x8x32xf32> to vector<2x8x16xf32>
    "tpu.trace_start"() <{level = 10 : i32, message = "bqk,bkd->bqd"}> : () -> ()
    %cst_8 = arith.constant dense<0.000000e+00> : vector<2x8x16xf32>
    %26 = tpu.matmul %24, %25, %cst_8 {dimension_numbers = #tpu.dot_dimension_numbers<[2], [1], [1], [2], [0, 0, 0, 1, 1, 2], [0], [0]>} : vector<2x8x8xf32>, vector<2x8x16xf32>, vector<2x8x16xf32> -> vector<2x8x16xf32>
    "tpu.trace_stop"() : () -> ()
    %27 = vector.extract_strided_slice %7 {offsets = [0, 0, 16], sizes = [2, 8, 16], strides = [1, 1, 1]} : vector<2x8x32xf32> to vector<2x8x16xf32>
    %28 = vector.extract_strided_slice %9 {offsets = [0, 0, 16], sizes = [2, 8, 16], strides = [1, 1, 1]} : vector<2x8x32xf32> to vector<2x8x16xf32>
    "tpu.trace_start"() <{level = 10 : i32, message = "bqd,bkd->bqk"}> : () -> ()
    %cst_9 = arith.constant dense<0.000000e+00> : vector<2x8x8xf32>
    %29 = tpu.matmul %27, %28, %cst_9 {dimension_numbers = #tpu.dot_dimension_numbers<[2], [2], [1], [1], [0, 0, 0, 1, 1, 1], [0], [0]>} : vector<2x8x16xf32>, vector<2x8x16xf32>, vector<2x8x8xf32> -> vector<2x8x8xf32>
    "tpu.trace_stop"() : () -> ()
    %cst_10 = arith.constant dense<0xFF800000> : vector<2x8xf32>
    %30 = vector.multi_reduction <maximumf>, %29, %cst_10 [2] : vector<2x8x8xf32> to vector<2x8xf32>
    %31 = vector.shape_cast %30 : vector<2x8xf32> to vector<2x8x1xf32>
    %32 = vector.broadcast %31 : vector<2x8x1xf32> to vector<2x8x8xf32>
    %33 = arith.subf %29, %32 : vector<2x8x8xf32>
    %34 = math.exp %33 : vector<2x8x8xf32>
    %cst_11 = arith.constant dense<0.000000e+00> : vector<2x8xf32>
    %35 = vector.multi_reduction <add>, %34, %cst_11 [2] : vector<2x8x8xf32> to vector<2x8xf32>
    %36 = vector.shape_cast %35 : vector<2x8xf32> to vector<2x8x1xf32>
    %37 = tpu.reciprocal %36 {approx = true} : vector<2x8x1xf32> -> vector<2x8x1xf32>
    %38 = vector.broadcast %37 : vector<2x8x1xf32> to vector<2x8x8xf32>
    %39 = arith.mulf %34, %38 : vector<2x8x8xf32>
    %40 = vector.extract_strided_slice %11 {offsets = [0, 0, 16], sizes = [2, 8, 16], strides = [1, 1, 1]} : vector<2x8x32xf32> to vector<2x8x16xf32>
    "tpu.trace_start"() <{level = 10 : i32, message = "bqk,bkd->bqd"}> : () -> ()
    %cst_12 = arith.constant dense<0.000000e+00> : vector<2x8x16xf32>
    %41 = tpu.matmul %39, %40, %cst_12 {dimension_numbers = #tpu.dot_dimension_numbers<[2], [1], [1], [2], [0, 0, 0, 1, 1, 2], [0], [0]>} : vector<2x8x8xf32>, vector<2x8x16xf32>, vector<2x8x16xf32> -> vector<2x8x16xf32>
    "tpu.trace_stop"() : () -> ()
    %42 = tpu.concatenate %26, %41 in 2 : vector<2x8x16xf32>, vector<2x8x16xf32> -> vector<2x8x32xf32>
    %43 = vector.shape_cast %42 : vector<2x8x32xf32> to vector<16x32xf32>
    %44 = arith.truncf %43 : vector<16x32xf32> to vector<16x32xbf16>
    %c0_13 = arith.constant 0 : index
    %c0_14 = arith.constant 0 : index
    %45 = vector.load %arg4[%c0_13, %c0_14] : memref<32x32xbf16, #tpu.memory_space<vmem>>, vector<32x32xbf16>
    %cst_15 = arith.constant dense<0.000000e+00> : vector<16x32xf32>
    %46 = tpu.matmul %44, %45, %cst_15 {dimension_numbers = #tpu.dot_dimension_numbers<[1], [0], [0], [1], [0, 0, 1, 1], [], []>} : vector<16x32xbf16>, vector<32x32xbf16>, vector<16x32xf32> -> vector<16x32xf32>
    %c0_16 = arith.constant 0 : index
    %c0_17 = arith.constant 0 : index
    %47 = vector.load %arg5[%c0_16, %c0_17] : memref<1x32xf32, #tpu.memory_space<vmem>>, vector<1x32xf32>
    %48 = vector.broadcast %47 : vector<1x32xf32> to vector<16x32xf32>
    %49 = arith.addf %46, %48 : vector<16x32xf32>
    %c0_18 = arith.constant 0 : index
    %c0_19 = arith.constant 0 : index
    %50 = vector.load %arg6[%c0_18, %c0_19] : memref<16x32xf32, #tpu.memory_space<vmem>>, vector<16x32xf32>
    tpu.vector_store %arg6[%c0_18, %c0_19], %49 {strides = array<i32>} : memref<16x32xf32, #tpu.memory_space<vmem>>, vector<16x32xf32>,
    return
  }
  func.func @transform_0(%arg0: i32) -> (i32, i32) {
    %c0_i32 = arith.constant 0 : i32
    %c0_i32_0 = arith.constant 0 : i32
    return %arg0, %c0_i32 : i32, i32
  }
  func.func @transform_1(%arg0: i32) -> (i32, i32) {
    %c0_i32 = arith.constant 0 : i32
    %c0_i32_0 = arith.constant 0 : i32
    %c0_i32_1 = arith.constant 0 : i32
    return %c0_i32, %c0_i32_0 : i32, i32
  }
  func.func @transform_2(%arg0: i32) -> (i32, i32) {
    %c0_i32 = arith.constant 0 : i32
    %c0_i32_0 = arith.constant 0 : i32
    %c0_i32_1 = arith.constant 0 : i32
    return %c0_i32, %c0_i32_0 : i32, i32
  }
  func.func @transform_3(%arg0: i32) -> (i32, i32) {
    %c0_i32 = arith.constant 0 : i32
    %c0_i32_0 = arith.constant 0 : i32
    %c0_i32_1 = arith.constant 0 : i32
    return %c0_i32, %c0_i32_0 : i32, i32
  }
  func.func @transform_4(%arg0: i32) -> (i32, i32) {
    %c0_i32 = arith.constant 0 : i32
    %c0_i32_0 = arith.constant 0 : i32
    %c0_i32_1 = arith.constant 0 : i32
    return %c0_i32, %c0_i32_0 : i32, i32
  }
  func.func @transform_5(%arg0: i32) -> (i32, i32) {
    %c0_i32 = arith.constant 0 : i32
    %c0_i32_0 = arith.constant 0 : i32
    return %arg0, %c0_i32 : i32, i32
  }
}

</mosaic_0001>

<llo_original>
// kernel: ragged_attention_forward.1
$region0: #{ragged_attention_forward.1}
  #allocation0 [shape = 'u32[]', space=smem, size = 0x4, offset = 0x4, fixed_abs, tag = 'smem constant byte address 0x4 - core index']
  #allocation1 [shape = 'u32[144,128]{1,0:T(1,128)}', space=vmem, size = 0x12000, scoped, tag = 'internal scratch']
  %s0 = inlined_call_operand.vmem [shape: bf16[16,32], index: 0, kind: input, shape index: {}]
  %s1 = inlined_call_operand.vmem [shape: bf16[32,96], index: 1, kind: input, shape index: {}]
  %s2 = inlined_call_operand.vmem [shape: f32[1,32], index: 2, kind: input, shape index: {}]
  %s3 = inlined_call_operand.vmem [shape: bf16[32,32], index: 3, kind: input, shape index: {}]
  %s4 = inlined_call_operand.vmem [shape: f32[1,32], index: 4, kind: input, shape index: {}]
  %s5 = inlined_call_operand.hbm [shape: f32[16,32], index: 5, kind: output, shape index: {}]
  %s6 = sld [smem:[#allocation0]]
  $region30: #{ragged_attention_forward.1} parent=0
    _
  %s8 = ssub.s32 1, %s6
  %s9 = scalar_select 0, %s8, %s6
  $region1: #{ragged_attention_forward.1} parent=0
    #allocation2 [shape = 'u8[8192]{0}', space=vmem, size = 0x2000, scoped, tag = 'output window, operand 0, single buffered']
    #allocation3 [shape = 's32[1]{0}', space=sflag, size = 0x4, scoped, tag = 'scoped memory for ragged_attention_forward.1']
    %10 = vsyncpa [#allocation3], 0
    // Predicated region
    $region2: #{ragged_attention_forward.1} parent=1 // pred_check
      _
    $region3: #{ragged_attention_forward.1} parent=1 // pred_check_branch
      %12 = sbr.rel (0) target = $region5
    $region4: #{ragged_attention_forward.1} parent=1 // pred_region
      _
    $region5: #{ragged_attention_forward.1} parent=1 // pred_fallthru
      _
    // Predicated region
    $region6: #{ragged_attention_forward.1} parent=1 // pred_check
      _
    $region7: #{ragged_attention_forward.1} parent=1 // pred_check_branch
      %14 = sbr.rel (0) target = $region9
    $region8: #{ragged_attention_forward.1} parent=1 // pred_region
      _
    $region9: #{ragged_attention_forward.1} parent=1 // pred_fallthru
      _
    // Predicated region
    $region10: #{ragged_attention_forward.1} parent=1 // pred_check
      _
    $region11: #{ragged_attention_forward.1} parent=1 // pred_check_branch
      %16 = sbr.rel (0) target = $region13
    $region12: #{ragged_attention_forward.1} parent=1 // pred_region
      _
    $region13: #{ragged_attention_forward.1} parent=1 // pred_fallthru
      _
    // Predicated region
    $region14: #{ragged_attention_forward.1} parent=1 // pred_check
      _
    $region15: #{ragged_attention_forward.1} parent=1 // pred_check_branch
      %18 = sbr.rel (0) target = $region17
    $region16: #{ragged_attention_forward.1} parent=1 // pred_region
      _
    $region17: #{ragged_attention_forward.1} parent=1 // pred_fallthru
      _
    // Predicated region
    $region18: #{ragged_attention_forward.1} parent=1 // pred_check
      _
    $region19: #{ragged_attention_forward.1} parent=1 // pred_check_branch
      %20 = sbr.rel (0) target = $region21
    $region20: #{ragged_attention_forward.1} parent=1 // pred_region
      _
    $region21: #{ragged_attention_forward.1} parent=1 // pred_fallthru
      _
    %v22 = vld [vmem:[%s0] sm:$0xf]
    %v23 = vld [vmem:[%s0 + $0x4] sm:$0xf]
    %v24 = vld [vmem:[%s1] sm:$0xf]
    %v25 = vld [vmem:[%s1 + $0x4] sm:$0xf]
    %v26 = vld [vmem:[%s1 + $0x8] sm:$0xf]
    %v27 = vld [vmem:[%s1 + $0xc] sm:$0xf]
    %v30 = vunpack.c.l.b16 %v22
    %v31 = vunpack.c.l.b16 %v23
    %v32 = vpack.c.b16 %v31, %v30
    %v37 = vunpack.c.l.b16 %v24
    %v38 = vunpack.c.l.b16 %v25
    %v39 = vunpack.c.l.b16 %v26
    %v40 = vunpack.c.l.b16 %v27
    %v41 = vpack.c.b16 %v38, %v37
    %v42 = vpack.c.b16 %v40, %v39
    %vm45 = vcmask 261120
    %v47 = vsel %vm45, %v32, 0
    %49 = vmatprep.subr.bf16.mxu0 0
    %50 = vmatpush1.bf16.msra.mxu0 %v41
    %51 = vmatprep.subr.bf16.mxu0 0
    %52 = vmatpush1.bf16.msra.mxu0 %v42
    %53 = vmatprep.subr.bf16.mxu0 0
    %54 = vmatpush1.bf16.msra.mxu0 0
    %55 = vmatprep.subr.bf16.mxu0 0
    %56 = vmatpush1.bf16.msra.mxu0 0
    %57 = vmatprep.subr.bf16.mxu0 0
    %58 = vmatpush1.bf16.msra.mxu0 0
    %59 = vmatprep.subr.bf16.mxu0 0
    %60 = vmatpush1.bf16.msra.mxu0 0
    %61 = vmatprep.subr.bf16.mxu0 0
    %62 = vmatpush1.bf16.msra.mxu0 0
    %63 = vmatprep.subr.bf16.mxu0 0
    %64 = vmatpush1.bf16.msra.mxu0 0
    %65 = vmatprep.subr.bf16.mxu0 0
    %66 = vmatpush1.bf16.msra.mxu0 0
    %67 = vmatprep.subr.bf16.mxu0 0
    %68 = vmatpush1.bf16.msra.mxu0 0
    %69 = vmatprep.subr.bf16.mxu0 0
    %70 = vmatpush1.bf16.msra.mxu0 0
    %71 = vmatprep.subr.bf16.mxu0 0
    %72 = vmatpush1.bf16.msra.mxu0 0
    %73 = vmatprep.subr.bf16.mxu0 0
    %74 = vmatpush1.bf16.msra.mxu0 0
    %75 = vmatprep.subr.bf16.mxu0 0
    %76 = vmatpush1.bf16.msra.mxu0 0
    %77 = vmatprep.subr.bf16.mxu0 0
    %78 = vmatpush1.bf16.msra.mxu0 0
    %79 = vmatprep.subr.bf16.mxu0 0
    %80 = vmatpush1.bf16.msra.mxu0 0
    %81 = vmatprep.mubr.bf16.mxu0 0
    %82 = vmatmul.mubr.bf16.gmra.mrb[0].mxu0 %v47
    %v83 = vpop.f32.mrb[0].mxu0
    %v84 = vadd.f32 0.0, %v83
    %v85 = vpop.f32.mrb[0].mxu0
    %v86 = vpop.f32.mrb[0].mxu0
    %v87 = vadd.f32 0.0, %v86
    %v88 = vpop.f32.mrb[0].mxu0
    %89 = vdwg.mxu0
    %v90 = vld [vmem:[%s2] sm:$0x1]
    %v92 = vlaneseq
    %v93 = vshrl.u32 %v92, 7
    %v94 = vsub.s32 0, %v93
    %v95 = vrot.slane %v90, %v94
    %v97 = vadd.f32 %v84, %v95
    %v98 = vadd.f32 %v87, %v95
    %100 = vrot.lane.b32.xlu0 %v84, 96
    %v101 = vpop.permute.xlu0 %100
    %vm102 = vcmask 130048
    %v104 = vsel %vm102, %v97, 0
    %v106 = vsel %vm102, %v101, 0
    %108 = vmatprep.subr.mxu0 0.0
    %109 = vmatpush1.xpose.msra.mxu0 %v106
    %110 = vmatprep.subr.mxu0 0.0
    %111 = vmatpush1.xpose.msra.mxu0 0.0
    %112 = vmatprep.subr.mxu0 0.0
    %113 = vmatpush1.xpose.msra.mxu0 0.0
    %114 = vmatprep.subr.mxu0 0.0
    %115 = vmatpush1.xpose.msra.mxu0 0.0
    %116 = vmatprep.subr.mxu0 0.0
    %117 = vmatpush1.xpose.msra.mxu0 0.0
    %118 = vmatprep.subr.mxu0 0.0
    %119 = vmatpush1.xpose.msra.mxu0 0.0
    %120 = vmatprep.subr.mxu0 0.0
    %121 = vmatpush1.xpose.msra.mxu0 0.0
    %122 = vmatprep.subr.mxu0 0.0
    %123 = vmatpush1.xpose.msra.mxu0 0.0
    %124 = vmatprep.subr.mxu0 0.0
    %125 = vmatpush1.xpose.msra.mxu0 0.0
    %126 = vmatprep.subr.mxu0 0.0
    %127 = vmatpush1.xpose.msra.mxu0 0.0
    %128 = vmatprep.subr.mxu0 0.0
    %129 = vmatpush1.xpose.msra.mxu0 0.0
    %130 = vmatprep.subr.mxu0 0.0
    %131 = vmatpush1.xpose.msra.mxu0 0.0
    %132 = vmatprep.subr.mxu0 0.0
    %133 = vmatpush1.xpose.msra.mxu0 0.0
    %134 = vmatprep.subr.mxu0 0.0
    %135 = vmatpush1.xpose.msra.mxu0 0.0
    %136 = vmatprep.subr.mxu0 0.0
    %137 = vmatpush1.xpose.msra.mxu0 0.0
    %138 = vmatprep.subr.mxu0 0.0
    %139 = vmatpush1.xpose.msra.mxu0 0.0
    %140 = vmatprep.subr.mxu0 0.0
    %141 = vmatpush1.xpose.msra.mxu0 0.0
    %142 = vmatprep.subr.mxu0 0.0
    %143 = vmatpush1.xpose.msra.mxu0 0.0
    %144 = vmatprep.subr.mxu0 0.0
    %145 = vmatpush1.xpose.msra.mxu0 0.0
    %146 = vmatprep.subr.mxu0 0.0
    %147 = vmatpush1.xpose.msra.mxu0 0.0
    %148 = vmatprep.subr.mxu0 0.0
    %149 = vmatpush1.xpose.msra.mxu0 0.0
    %150 = vmatprep.subr.mxu0 0.0
    %151 = vmatpush1.xpose.msra.mxu0 0.0
    %152 = vmatprep.subr.mxu0 0.0
    %153 = vmatpush1.xpose.msra.mxu0 0.0
    %154 = vmatprep.subr.mxu0 0.0
    %155 = vmatpush1.xpose.msra.mxu0 0.0
    %156 = vmatprep.subr.mxu0 0.0
    %157 = vmatpush1.xpose.msra.mxu0 0.0
    %158 = vmatprep.subr.mxu0 0.0
    %159 = vmatpush1.xpose.msra.mxu0 0.0
    %160 = vmatprep.subr.mxu0 0.0
    %161 = vmatpush1.xpose.msra.mxu0 0.0
    %162 = vmatprep.subr.mxu0 0.0
    %163 = vmatpush1.xpose.msra.mxu0 0.0
    %164 = vmatprep.subr.mxu0 0.0
    %165 = vmatpush1.xpose.msra.mxu0 0.0
    %166 = vmatprep.subr.mxu0 0.0
    %167 = vmatpush1.xpose.msra.mxu0 0.0
    %168 = vmatprep.subr.mxu0 0.0
    %169 = vmatpush1.xpose.msra.mxu0 0.0
    %170 = vmatprep.subr.mxu0 0.0
    %171 = vmatpush1.xpose.msra.mxu0 0.0
    %172 = vmatprep.mubr.f32.mxu0 0.0
    %173 = vmatmul.mubr.f32.gmra.mrb[0].mxu0 %v104
    %v174 = vpop.f32.mrb[0].mxu0
    %v175 = vadd.f32 0.0, %v174
    %v176 = vpop.f32.mrb[0].mxu0
    %177 = vdwg.mxu0
    %179 = vrot.lane.b32.xlu0 %v87, 96
    %v180 = vpop.permute.xlu0 %179
    %v182 = vsel %vm102, %v98, 0
    %v184 = vsel %vm102, %v180, 0
    %186 = vmatprep.subr.mxu0 0.0
    %187 = vmatpush1.xpose.msra.mxu0 %v184
    %188 = vmatprep.subr.mxu0 0.0
    %189 = vmatpush1.xpose.msra.mxu0 0.0
    %190 = vmatprep.subr.mxu0 0.0
    %191 = vmatpush1.xpose.msra.mxu0 0.0
    %192 = vmatprep.subr.mxu0 0.0
    %193 = vmatpush1.xpose.msra.mxu0 0.0
    %194 = vmatprep.subr.mxu0 0.0
    %195 = vmatpush1.xpose.msra.mxu0 0.0
    %196 = vmatprep.subr.mxu0 0.0
    %197 = vmatpush1.xpose.msra.mxu0 0.0
    %198 = vmatprep.subr.mxu0 0.0
    %199 = vmatpush1.xpose.msra.mxu0 0.0
    %200 = vmatprep.subr.mxu0 0.0
    %201 = vmatpush1.xpose.msra.mxu0 0.0
    %202 = vmatprep.subr.mxu0 0.0
    %203 = vmatpush1.xpose.msra.mxu0 0.0
    %204 = vmatprep.subr.mxu0 0.0
    %205 = vmatpush1.xpose.msra.mxu0 0.0
    %206 = vmatprep.subr.mxu0 0.0
    %207 = vmatpush1.xpose.msra.mxu0 0.0
    %208 = vmatprep.subr.mxu0 0.0
    %209 = vmatpush1.xpose.msra.mxu0 0.0
    %210 = vmatprep.subr.mxu0 0.0
    %211 = vmatpush1.xpose.msra.mxu0 0.0
    %212 = vmatprep.subr.mxu0 0.0
    %213 = vmatpush1.xpose.msra.mxu0 0.0
    %214 = vmatprep.subr.mxu0 0.0
    %215 = vmatpush1.xpose.msra.mxu0 0.0
    %216 = vmatprep.subr.mxu0 0.0
    %217 = vmatpush1.xpose.msra.mxu0 0.0
    %218 = vmatprep.subr.mxu0 0.0
    %219 = vmatpush1.xpose.msra.mxu0 0.0
    %220 = vmatprep.subr.mxu0 0.0
    %221 = vmatpush1.xpose.msra.mxu0 0.0
    %222 = vmatprep.subr.mxu0 0.0
    %223 = vmatpush1.xpose.msra.mxu0 0.0
    %224 = vmatprep.subr.mxu0 0.0
    %225 = vmatpush1.xpose.msra.mxu0 0.0
    %226 = vmatprep.subr.mxu0 0.0
    %227 = vmatpush1.xpose.msra.mxu0 0.0
    %228 = vmatprep.subr.mxu0 0.0
    %229 = vmatpush1.xpose.msra.mxu0 0.0
    %230 = vmatprep.subr.mxu0 0.0
    %231 = vmatpush1.xpose.msra.mxu0 0.0
    %232 = vmatprep.subr.mxu0 0.0
    %233 = vmatpush1.xpose.msra.mxu0 0.0
    %234 = vmatprep.subr.mxu0 0.0
    %235 = vmatpush1.xpose.msra.mxu0 0.0
    %236 = vmatprep.subr.mxu0 0.0
    %237 = vmatpush1.xpose.msra.mxu0 0.0
    %238 = vmatprep.subr.mxu0 0.0
    %239 = vmatpush1.xpose.msra.mxu0 0.0
    %240 = vmatprep.subr.mxu0 0.0
    %241 = vmatpush1.xpose.msra.mxu0 0.0
    %242 = vmatprep.subr.mxu0 0.0
    %243 = vmatpush1.xpose.msra.mxu0 0.0
    %244 = vmatprep.subr.mxu0 0.0
    %245 = vmatpush1.xpose.msra.mxu0 0.0
    %246 = vmatprep.subr.mxu0 0.0
    %247 = vmatpush1.xpose.msra.mxu0 0.0
    %248 = vmatprep.subr.mxu0 0.0
    %249 = vmatpush1.xpose.msra.mxu0 0.0
    %250 = vmatprep.mubr.f32.mxu0 0.0
    %251 = vmatmul.mubr.f32.gmra.mrb[0].mxu0 %v182
    %v252 = vpop.f32.mrb[0].mxu0
    %v253 = vadd.f32 0.0, %v252
    %v254 = vpop.f32.mrb[0].mxu0
    %255 = vdwg.mxu0
    %vm256 = vcmask 64512
    %v257 = vsel %vm256, %v175, -inf
    %258 = vmax.xlane.f32.xlu0 %v257
    %v259 = vpop.xlane.xlu0 %258
    %v260 = vsel %vm256, %v253, -inf
    %261 = vmax.xlane.f32.xlu0 %v260
    %v262 = vpop.xlane.xlu0 %261
    %v263 = vsub.f32 %v175, %v259
    %v264 = vsub.f32 %v253, %v262
    %v265 = vmul.f32 %v263, 1.442695
    %v266 = vpow.pop %v265
    %v267 = vmul.f32 %v264, 1.442695
    %v268 = vpow.pop %v267
    %v269 = vsel %vm256, %v266, 0.0
    %270 = vadd.xlane.f32.xlu0 %v269
    %v271 = vpop.xlane.xlu0 %270
    %v272 = vsel %vm256, %v268, 0.0
    %273 = vadd.xlane.f32.xlu0 %v272
    %v274 = vpop.xlane.xlu0 %273
    %v275 = vrcp.pop %v271
    %v276 = vrcp.pop %v274
    %v277 = vmul.f32 %v266, %v275
    %v278 = vmul.f32 %v268, %v276
    %279 = vrot.lane.b32.xlu0 %v84, 64
    %v280 = vpop.permute.xlu0 %279
    %v283 = vsel %vm256, %v277, 0
    %285 = vmatprep.subr.mxu0 0.0
    %286 = vmatpush1.msra.mxu0 %v280
    %287 = vmatprep.subr.mxu0 0.0
    %288 = vmatpush1.msra.mxu0 0.0
    %289 = vmatprep.subr.mxu0 0.0
    %290 = vmatpush1.msra.mxu0 0.0
    %291 = vmatprep.subr.mxu0 0.0
    %292 = vmatpush1.msra.mxu0 0.0
    %293 = vmatprep.subr.mxu0 0.0
    %294 = vmatpush1.msra.mxu0 0.0
    %295 = vmatprep.subr.mxu0 0.0
    %296 = vmatpush1.msra.mxu0 0.0
    %297 = vmatprep.subr.mxu0 0.0
    %298 = vmatpush1.msra.mxu0 0.0
    %299 = vmatprep.subr.mxu0 0.0
    %300 = vmatpush1.msra.mxu0 0.0
    %301 = vmatprep.subr.mxu0 0.0
    %302 = vmatpush1.msra.mxu0 0.0
    %303 = vmatprep.subr.mxu0 0.0
    %304 = vmatpush1.msra.mxu0 0.0
    %305 = vmatprep.subr.mxu0 0.0
    %306 = vmatpush1.msra.mxu0 0.0
    %307 = vmatprep.subr.mxu0 0.0
    %308 = vmatpush1.msra.mxu0 0.0
    %309 = vmatprep.subr.mxu0 0.0
    %310 = vmatpush1.msra.mxu0 0.0
    %311 = vmatprep.subr.mxu0 0.0
    %312 = vmatpush1.msra.mxu0 0.0
    %313 = vmatprep.subr.mxu0 0.0
    %314 = vmatpush1.msra.mxu0 0.0
    %315 = vmatprep.subr.mxu0 0.0
    %316 = vmatpush1.msra.mxu0 0.0
    %317 = vmatprep.subr.mxu0 0.0
    %318 = vmatpush1.msra.mxu0 0.0
    %319 = vmatprep.subr.mxu0 0.0
    %320 = vmatpush1.msra.mxu0 0.0
    %321 = vmatprep.subr.mxu0 0.0
    %322 = vmatpush1.msra.mxu0 0.0
    %323 = vmatprep.subr.mxu0 0.0
    %324 = vmatpush1.msra.mxu0 0.0
    %325 = vmatprep.subr.mxu0 0.0
    %326 = vmatpush1.msra.mxu0 0.0
    %327 = vmatprep.subr.mxu0 0.0
    %328 = vmatpush1.msra.mxu0 0.0
    %329 = vmatprep.subr.mxu0 0.0
    %330 = vmatpush1.msra.mxu0 0.0
    %331 = vmatprep.subr.mxu0 0.0
    %332 = vmatpush1.msra.mxu0 0.0
    %333 = vmatprep.subr.mxu0 0.0
    %334 = vmatpush1.msra.mxu0 0.0
    %335 = vmatprep.subr.mxu0 0.0
    %336 = vmatpush1.msra.mxu0 0.0
    %337 = vmatprep.subr.mxu0 0.0
    %338 = vmatpush1.msra.mxu0 0.0
    %339 = vmatprep.subr.mxu0 0.0
    %340 = vmatpush1.msra.mxu0 0.0
    %341 = vmatprep.subr.mxu0 0.0
    %342 = vmatpush1.msra.mxu0 0.0
    %343 = vmatprep.subr.mxu0 0.0
    %344 = vmatpush1.msra.mxu0 0.0
    %345 = vmatprep.subr.mxu0 0.0
    %346 = vmatpush1.msra.mxu0 0.0
    %347 = vmatprep.subr.mxu0 0.0
    %348 = vmatpush1.msra.mxu0 0.0
    %349 = vmatprep.mubr.f32.mxu0 0.0
    %350 = vmatmul.mubr.f32.gmra.mrb[0].mxu0 %v283
    %v351 = vpop.f32.mrb[0].mxu0
    %v352 = vadd.f32 0.0, %v351
    %v353 = vpop.f32.mrb[0].mxu0
    %354 = vdwg.mxu0
    %355 = vrot.lane.b32.xlu0 %v87, 64
    %v356 = vpop.permute.xlu0 %355
    %v359 = vsel %vm256, %v278, 0
    %361 = vmatprep.subr.mxu0 0.0
    %362 = vmatpush1.msra.mxu0 %v356
    %363 = vmatprep.subr.mxu0 0.0
    %364 = vmatpush1.msra.mxu0 0.0
    %365 = vmatprep.subr.mxu0 0.0
    %366 = vmatpush1.msra.mxu0 0.0
    %367 = vmatprep.subr.mxu0 0.0
    %368 = vmatpush1.msra.mxu0 0.0
    %369 = vmatprep.subr.mxu0 0.0
    %370 = vmatpush1.msra.mxu0 0.0
    %371 = vmatprep.subr.mxu0 0.0
    %372 = vmatpush1.msra.mxu0 0.0
    %373 = vmatprep.subr.mxu0 0.0
    %374 = vmatpush1.msra.mxu0 0.0
    %375 = vmatprep.subr.mxu0 0.0
    %376 = vmatpush1.msra.mxu0 0.0
    %377 = vmatprep.subr.mxu0 0.0
    %378 = vmatpush1.msra.mxu0 0.0
    %379 = vmatprep.subr.mxu0 0.0
    %380 = vmatpush1.msra.mxu0 0.0
    %381 = vmatprep.subr.mxu0 0.0
    %382 = vmatpush1.msra.mxu0 0.0
    %383 = vmatprep.subr.mxu0 0.0
    %384 = vmatpush1.msra.mxu0 0.0
    %385 = vmatprep.subr.mxu0 0.0
    %386 = vmatpush1.msra.mxu0 0.0
    %387 = vmatprep.subr.mxu0 0.0
    %388 = vmatpush1.msra.mxu0 0.0
    %389 = vmatprep.subr.mxu0 0.0
    %390 = vmatpush1.msra.mxu0 0.0
    %391 = vmatprep.subr.mxu0 0.0
    %392 = vmatpush1.msra.mxu0 0.0
    %393 = vmatprep.subr.mxu0 0.0
    %394 = vmatpush1.msra.mxu0 0.0
    %395 = vmatprep.subr.mxu0 0.0
    %396 = vmatpush1.msra.mxu0 0.0
    %397 = vmatprep.subr.mxu0 0.0
    %398 = vmatpush1.msra.mxu0 0.0
    %399 = vmatprep.subr.mxu0 0.0
    %400 = vmatpush1.msra.mxu0 0.0
    %401 = vmatprep.subr.mxu0 0.0
    %402 = vmatpush1.msra.mxu0 0.0
    %403 = vmatprep.subr.mxu0 0.0
    %404 = vmatpush1.msra.mxu0 0.0
    %405 = vmatprep.subr.mxu0 0.0
    %406 = vmatpush1.msra.mxu0 0.0
    %407 = vmatprep.subr.mxu0 0.0
    %408 = vmatpush1.msra.mxu0 0.0
    %409 = vmatprep.subr.mxu0 0.0
    %410 = vmatpush1.msra.mxu0 0.0
    %411 = vmatprep.subr.mxu0 0.0
    %412 = vmatpush1.msra.mxu0 0.0
    %413 = vmatprep.subr.mxu0 0.0
    %414 = vmatpush1.msra.mxu0 0.0
    %415 = vmatprep.subr.mxu0 0.0
    %416 = vmatpush1.msra.mxu0 0.0
    %417 = vmatprep.subr.mxu0 0.0
    %418 = vmatpush1.msra.mxu0 0.0
    %419 = vmatprep.subr.mxu0 0.0
    %420 = vmatpush1.msra.mxu0 0.0
    %421 = vmatprep.subr.mxu0 0.0
    %422 = vmatpush1.msra.mxu0 0.0
    %423 = vmatprep.subr.mxu0 0.0
    %424 = vmatpush1.msra.mxu0 0.0
    %425 = vmatprep.mubr.f32.mxu0 0.0
    %426 = vmatmul.mubr.f32.gmra.mrb[0].mxu0 %v359
    %v427 = vpop.f32.mrb[0].mxu0
    %v428 = vadd.f32 0.0, %v427
    %v429 = vpop.f32.mrb[0].mxu0
    %430 = vdwg.mxu0
    %431 = vrot.lane.b32.xlu0 %v97, 112
    %v432 = vpop.permute.xlu0 %431
    %433 = vrot.lane.b32.xlu0 %v84, 80
    %v434 = vpop.permute.xlu0 %433
    %v435 = vsel %vm102, %v432, 0
    %v437 = vsel %vm102, %v434, 0
    %439 = vmatprep.subr.mxu0 0.0
    %440 = vmatpush1.xpose.msra.mxu0 %v437
    %441 = vmatprep.subr.mxu0 0.0
    %442 = vmatpush1.xpose.msra.mxu0 0.0
    %443 = vmatprep.subr.mxu0 0.0
    %444 = vmatpush1.xpose.msra.mxu0 0.0
    %445 = vmatprep.subr.mxu0 0.0
    %446 = vmatpush1.xpose.msra.mxu0 0.0
    %447 = vmatprep.subr.mxu0 0.0
    %448 = vmatpush1.xpose.msra.mxu0 0.0
    %449 = vmatprep.subr.mxu0 0.0
    %450 = vmatpush1.xpose.msra.mxu0 0.0
    %451 = vmatprep.subr.mxu0 0.0
    %452 = vmatpush1.xpose.msra.mxu0 0.0
    %453 = vmatprep.subr.mxu0 0.0
    %454 = vmatpush1.xpose.msra.mxu0 0.0
    %455 = vmatprep.subr.mxu0 0.0
    %456 = vmatpush1.xpose.msra.mxu0 0.0
    %457 = vmatprep.subr.mxu0 0.0
    %458 = vmatpush1.xpose.msra.mxu0 0.0
    %459 = vmatprep.subr.mxu0 0.0
    %460 = vmatpush1.xpose.msra.mxu0 0.0
    %461 = vmatprep.subr.mxu0 0.0
    %462 = vmatpush1.xpose.msra.mxu0 0.0
    %463 = vmatprep.subr.mxu0 0.0
    %464 = vmatpush1.xpose.msra.mxu0 0.0
    %465 = vmatprep.subr.mxu0 0.0
    %466 = vmatpush1.xpose.msra.mxu0 0.0
    %467 = vmatprep.subr.mxu0 0.0
    %468 = vmatpush1.xpose.msra.mxu0 0.0
    %469 = vmatprep.subr.mxu0 0.0
    %470 = vmatpush1.xpose.msra.mxu0 0.0
    %471 = vmatprep.subr.mxu0 0.0
    %472 = vmatpush1.xpose.msra.mxu0 0.0
    %473 = vmatprep.subr.mxu0 0.0
    %474 = vmatpush1.xpose.msra.mxu0 0.0
    %475 = vmatprep.subr.mxu0 0.0
    %476 = vmatpush1.xpose.msra.mxu0 0.0
    %477 = vmatprep.subr.mxu0 0.0
    %478 = vmatpush1.xpose.msra.mxu0 0.0
    %479 = vmatprep.subr.mxu0 0.0
    %480 = vmatpush1.xpose.msra.mxu0 0.0
    %481 = vmatprep.subr.mxu0 0.0
    %482 = vmatpush1.xpose.msra.mxu0 0.0
    %483 = vmatprep.subr.mxu0 0.0
    %484 = vmatpush1.xpose.msra.mxu0 0.0
    %485 = vmatprep.subr.mxu0 0.0
    %486 = vmatpush1.xpose.msra.mxu0 0.0
    %487 = vmatprep.subr.mxu0 0.0
    %488 = vmatpush1.xpose.msra.mxu0 0.0
    %489 = vmatprep.subr.mxu0 0.0
    %490 = vmatpush1.xpose.msra.mxu0 0.0
    %491 = vmatprep.subr.mxu0 0.0
    %492 = vmatpush1.xpose.msra.mxu0 0.0
    %493 = vmatprep.subr.mxu0 0.0
    %494 = vmatpush1.xpose.msra.mxu0 0.0
    %495 = vmatprep.subr.mxu0 0.0
    %496 = vmatpush1.xpose.msra.mxu0 0.0
    %497 = vmatprep.subr.mxu0 0.0
    %498 = vmatpush1.xpose.msra.mxu0 0.0
    %499 = vmatprep.subr.mxu0 0.0
    %500 = vmatpush1.xpose.msra.mxu0 0.0
    %501 = vmatprep.subr.mxu0 0.0
    %502 = vmatpush1.xpose.msra.mxu0 0.0
    %503 = vmatprep.mubr.f32.mxu0 0.0
    %504 = vmatmul.mubr.f32.gmra.mrb[0].mxu0 %v435
    %v505 = vpop.f32.mrb[0].mxu0
    %v506 = vadd.f32 0.0, %v505
    %v507 = vpop.f32.mrb[0].mxu0
    %508 = vdwg.mxu0
    %509 = vrot.lane.b32.xlu0 %v98, 112
    %v510 = vpop.permute.xlu0 %509
    %511 = vrot.lane.b32.xlu0 %v87, 80
    %v512 = vpop.permute.xlu0 %511
    %v513 = vsel %vm102, %v510, 0
    %v515 = vsel %vm102, %v512, 0
    %517 = vmatprep.subr.mxu0 0.0
    %518 = vmatpush1.xpose.msra.mxu0 %v515
    %519 = vmatprep.subr.mxu0 0.0
    %520 = vmatpush1.xpose.msra.mxu0 0.0
    %521 = vmatprep.subr.mxu0 0.0
    %522 = vmatpush1.xpose.msra.mxu0 0.0
    %523 = vmatprep.subr.mxu0 0.0
    %524 = vmatpush1.xpose.msra.mxu0 0.0
    %525 = vmatprep.subr.mxu0 0.0
    %526 = vmatpush1.xpose.msra.mxu0 0.0
    %527 = vmatprep.subr.mxu0 0.0
    %528 = vmatpush1.xpose.msra.mxu0 0.0
    %529 = vmatprep.subr.mxu0 0.0
    %530 = vmatpush1.xpose.msra.mxu0 0.0
    %531 = vmatprep.subr.mxu0 0.0
    %532 = vmatpush1.xpose.msra.mxu0 0.0
    %533 = vmatprep.subr.mxu0 0.0
    %534 = vmatpush1.xpose.msra.mxu0 0.0
    %535 = vmatprep.subr.mxu0 0.0
    %536 = vmatpush1.xpose.msra.mxu0 0.0
    %537 = vmatprep.subr.mxu0 0.0
    %538 = vmatpush1.xpose.msra.mxu0 0.0
    %539 = vmatprep.subr.mxu0 0.0
    %540 = vmatpush1.xpose.msra.mxu0 0.0
    %541 = vmatprep.subr.mxu0 0.0
    %542 = vmatpush1.xpose.msra.mxu0 0.0
    %543 = vmatprep.subr.mxu0 0.0
    %544 = vmatpush1.xpose.msra.mxu0 0.0
    %545 = vmatprep.subr.mxu0 0.0
    %546 = vmatpush1.xpose.msra.mxu0 0.0
    %547 = vmatprep.subr.mxu0 0.0
    %548 = vmatpush1.xpose.msra.mxu0 0.0
    %549 = vmatprep.subr.mxu0 0.0
    %550 = vmatpush1.xpose.msra.mxu0 0.0
    %551 = vmatprep.subr.mxu0 0.0
    %552 = vmatpush1.xpose.msra.mxu0 0.0
    %553 = vmatprep.subr.mxu0 0.0
    %554 = vmatpush1.xpose.msra.mxu0 0.0
    %555 = vmatprep.subr.mxu0 0.0
    %556 = vmatpush1.xpose.msra.mxu0 0.0
    %557 = vmatprep.subr.mxu0 0.0
    %558 = vmatpush1.xpose.msra.mxu0 0.0
    %559 = vmatprep.subr.mxu0 0.0
    %560 = vmatpush1.xpose.msra.mxu0 0.0
    %561 = vmatprep.subr.mxu0 0.0
    %562 = vmatpush1.xpose.msra.mxu0 0.0
    %563 = vmatprep.subr.mxu0 0.0
    %564 = vmatpush1.xpose.msra.mxu0 0.0
    %565 = vmatprep.subr.mxu0 0.0
    %566 = vmatpush1.xpose.msra.mxu0 0.0
    %567 = vmatprep.subr.mxu0 0.0
    %568 = vmatpush1.xpose.msra.mxu0 0.0
    %569 = vmatprep.subr.mxu0 0.0
    %570 = vmatpush1.xpose.msra.mxu0 0.0
    %571 = vmatprep.subr.mxu0 0.0
    %572 = vmatpush1.xpose.msra.mxu0 0.0
    %573 = vmatprep.subr.mxu0 0.0
    %574 = vmatpush1.xpose.msra.mxu0 0.0
    %575 = vmatprep.subr.mxu0 0.0
    %576 = vmatpush1.xpose.msra.mxu0 0.0
    %577 = vmatprep.subr.mxu0 0.0
    %578 = vmatpush1.xpose.msra.mxu0 0.0
    %579 = vmatprep.subr.mxu0 0.0
    %580 = vmatpush1.xpose.msra.mxu0 0.0
    %581 = vmatprep.mubr.f32.mxu0 0.0
    %582 = vmatmul.mubr.f32.gmra.mrb[0].mxu0 %v513
    %v583 = vpop.f32.mrb[0].mxu0
    %v584 = vadd.f32 0.0, %v583
    %v585 = vpop.f32.mrb[0].mxu0
    %586 = vdwg.mxu0
    %v587 = vsel %vm256, %v506, -inf
    %588 = vmax.xlane.f32.xlu0 %v587
    %v589 = vpop.xlane.xlu0 %588
    %v590 = vsel %vm256, %v584, -inf
    %591 = vmax.xlane.f32.xlu0 %v590
    %v592 = vpop.xlane.xlu0 %591
    %v593 = vsub.f32 %v506, %v589
    %v594 = vsub.f32 %v584, %v592
    %v595 = vmul.f32 %v593, 1.442695
    %v596 = vpow.pop %v595
    %v597 = vmul.f32 %v594, 1.442695
    %v598 = vpow.pop %v597
    %v599 = vsel %vm256, %v596, 0.0
    %600 = vadd.xlane.f32.xlu0 %v599
    %v601 = vpop.xlane.xlu0 %600
    %v602 = vsel %vm256, %v598, 0.0
    %603 = vadd.xlane.f32.xlu0 %v602
    %v604 = vpop.xlane.xlu0 %603
    %v605 = vrcp.pop %v601
    %v606 = vrcp.pop %v604
    %v607 = vmul.f32 %v596, %v605
    %v608 = vmul.f32 %v598, %v606
    %609 = vrot.lane.b32.xlu0 %v84, 48
    %v610 = vpop.permute.xlu0 %609
    %v613 = vsel %vm256, %v607, 0
    %615 = vmatprep.subr.mxu0 0.0
    %616 = vmatpush1.msra.mxu0 %v610
    %617 = vmatprep.subr.mxu0 0.0
    %618 = vmatpush1.msra.mxu0 0.0
    %619 = vmatprep.subr.mxu0 0.0
    %620 = vmatpush1.msra.mxu0 0.0
    %621 = vmatprep.subr.mxu0 0.0
    %622 = vmatpush1.msra.mxu0 0.0
    %623 = vmatprep.subr.mxu0 0.0
    %624 = vmatpush1.msra.mxu0 0.0
    %625 = vmatprep.subr.mxu0 0.0
    %626 = vmatpush1.msra.mxu0 0.0
    %627 = vmatprep.subr.mxu0 0.0
    %628 = vmatpush1.msra.mxu0 0.0
    %629 = vmatprep.subr.mxu0 0.0
    %630 = vmatpush1.msra.mxu0 0.0
    %631 = vmatprep.subr.mxu0 0.0
    %632 = vmatpush1.msra.mxu0 0.0
    %633 = vmatprep.subr.mxu0 0.0
    %634 = vmatpush1.msra.mxu0 0.0
    %635 = vmatprep.subr.mxu0 0.0
    %636 = vmatpush1.msra.mxu0 0.0
    %637 = vmatprep.subr.mxu0 0.0
    %638 = vmatpush1.msra.mxu0 0.0
    %639 = vmatprep.subr.mxu0 0.0
    %640 = vmatpush1.msra.mxu0 0.0
    %641 = vmatprep.subr.mxu0 0.0
    %642 = vmatpush1.msra.mxu0 0.0
    %643 = vmatprep.subr.mxu0 0.0
    %644 = vmatpush1.msra.mxu0 0.0
    %645 = vmatprep.subr.mxu0 0.0
    %646 = vmatpush1.msra.mxu0 0.0
    %647 = vmatprep.subr.mxu0 0.0
    %648 = vmatpush1.msra.mxu0 0.0
    %649 = vmatprep.subr.mxu0 0.0
    %650 = vmatpush1.msra.mxu0 0.0
    %651 = vmatprep.subr.mxu0 0.0
    %652 = vmatpush1.msra.mxu0 0.0
    %653 = vmatprep.subr.mxu0 0.0
    %654 = vmatpush1.msra.mxu0 0.0
    %655 = vmatprep.subr.mxu0 0.0
    %656 = vmatpush1.msra.mxu0 0.0
    %657 = vmatprep.subr.mxu0 0.0
    %658 = vmatpush1.msra.mxu0 0.0
    %659 = vmatprep.subr.mxu0 0.0
    %660 = vmatpush1.msra.mxu0 0.0
    %661 = vmatprep.subr.mxu0 0.0
    %662 = vmatpush1.msra.mxu0 0.0
    %663 = vmatprep.subr.mxu0 0.0
    %664 = vmatpush1.msra.mxu0 0.0
    %665 = vmatprep.subr.mxu0 0.0
    %666 = vmatpush1.msra.mxu0 0.0
    %667 = vmatprep.subr.mxu0 0.0
    %668 = vmatpush1.msra.mxu0 0.0
    %669 = vmatprep.subr.mxu0 0.0
    %670 = vmatpush1.msra.mxu0 0.0
    %671 = vmatprep.subr.mxu0 0.0
    %672 = vmatpush1.msra.mxu0 0.0
    %673 = vmatprep.subr.mxu0 0.0
    %674 = vmatpush1.msra.mxu0 0.0
    %675 = vmatprep.subr.mxu0 0.0
    %676 = vmatpush1.msra.mxu0 0.0
    %677 = vmatprep.subr.mxu0 0.0
    %678 = vmatpush1.msra.mxu0 0.0
    %679 = vmatprep.mubr.f32.mxu0 0.0
    %680 = vmatmul.mubr.f32.gmra.mrb[0].mxu0 %v613
    %v681 = vpop.f32.mrb[0].mxu0
    %v682 = vadd.f32 0.0, %v681
    %v683 = vpop.f32.mrb[0].mxu0
    %684 = vdwg.mxu0
    %685 = vrot.lane.b32.xlu0 %v87, 48
    %v686 = vpop.permute.xlu0 %685
    %v689 = vsel %vm256, %v608, 0
    %691 = vmatprep.subr.mxu0 0.0
    %692 = vmatpush1.msra.mxu0 %v686
    %693 = vmatprep.subr.mxu0 0.0
    %694 = vmatpush1.msra.mxu0 0.0
    %695 = vmatprep.subr.mxu0 0.0
    %696 = vmatpush1.msra.mxu0 0.0
    %697 = vmatprep.subr.mxu0 0.0
    %698 = vmatpush1.msra.mxu0 0.0
    %699 = vmatprep.subr.mxu0 0.0
    %700 = vmatpush1.msra.mxu0 0.0
    %701 = vmatprep.subr.mxu0 0.0
    %702 = vmatpush1.msra.mxu0 0.0
    %703 = vmatprep.subr.mxu0 0.0
    %704 = vmatpush1.msra.mxu0 0.0
    %705 = vmatprep.subr.mxu0 0.0
    %706 = vmatpush1.msra.mxu0 0.0
    %707 = vmatprep.subr.mxu0 0.0
    %708 = vmatpush1.msra.mxu0 0.0
    %709 = vmatprep.subr.mxu0 0.0
    %710 = vmatpush1.msra.mxu0 0.0
    %711 = vmatprep.subr.mxu0 0.0
    %712 = vmatpush1.msra.mxu0 0.0
    %713 = vmatprep.subr.mxu0 0.0
    %714 = vmatpush1.msra.mxu0 0.0
    %715 = vmatprep.subr.mxu0 0.0
    %716 = vmatpush1.msra.mxu0 0.0
    %717 = vmatprep.subr.mxu0 0.0
    %718 = vmatpush1.msra.mxu0 0.0
    %719 = vmatprep.subr.mxu0 0.0
    %720 = vmatpush1.msra.mxu0 0.0
    %721 = vmatprep.subr.mxu0 0.0
    %722 = vmatpush1.msra.mxu0 0.0
    %723 = vmatprep.subr.mxu0 0.0
    %724 = vmatpush1.msra.mxu0 0.0
    %725 = vmatprep.subr.mxu0 0.0
    %726 = vmatpush1.msra.mxu0 0.0
    %727 = vmatprep.subr.mxu0 0.0
    %728 = vmatpush1.msra.mxu0 0.0
    %729 = vmatprep.subr.mxu0 0.0
    %730 = vmatpush1.msra.mxu0 0.0
    %731 = vmatprep.subr.mxu0 0.0
    %732 = vmatpush1.msra.mxu0 0.0
    %733 = vmatprep.subr.mxu0 0.0
    %734 = vmatpush1.msra.mxu0 0.0
    %735 = vmatprep.subr.mxu0 0.0
    %736 = vmatpush1.msra.mxu0 0.0
    %737 = vmatprep.subr.mxu0 0.0
    %738 = vmatpush1.msra.mxu0 0.0
    %739 = vmatprep.subr.mxu0 0.0
    %740 = vmatpush1.msra.mxu0 0.0
    %741 = vmatprep.subr.mxu0 0.0
    %742 = vmatpush1.msra.mxu0 0.0
    %743 = vmatprep.subr.mxu0 0.0
    %744 = vmatpush1.msra.mxu0 0.0
    %745 = vmatprep.subr.mxu0 0.0
    %746 = vmatpush1.msra.mxu0 0.0
    %747 = vmatprep.subr.mxu0 0.0
    %748 = vmatpush1.msra.mxu0 0.0
    %749 = vmatprep.subr.mxu0 0.0
    %750 = vmatpush1.msra.mxu0 0.0
    %751 = vmatprep.subr.mxu0 0.0
    %752 = vmatpush1.msra.mxu0 0.0
    %753 = vmatprep.subr.mxu0 0.0
    %754 = vmatpush1.msra.mxu0 0.0
    %755 = vmatprep.mubr.f32.mxu0 0.0
    %756 = vmatmul.mubr.f32.gmra.mrb[0].mxu0 %v689
    %v757 = vpop.f32.mrb[0].mxu0
    %v758 = vadd.f32 0.0, %v757
    %v759 = vpop.f32.mrb[0].mxu0
    %760 = vdwg.mxu0
    %763 = vrot.lane.b32.xlu0 %v682, 16
    %v764 = vpop.permute.xlu0 %763
    %765 = vrot.lane.b32.xlu0 %v758, 16
    %v766 = vpop.permute.xlu0 %765
    %v769 = vsel %vm102, %v352, %v764
    %v770 = vsel %vm102, %v428, %v766
    %v771 = vpack.c.bf16 %v770, %v769
    %v772 = vld [vmem:[%s3] sm:$0xf]
    %v773 = vld [vmem:[%s3 + $0x4] sm:$0xf]
    %v774 = vld [vmem:[%s3 + $0x8] sm:$0xf]
    %v775 = vld [vmem:[%s3 + $0xc] sm:$0xf]
    %v776 = vld [vmem:[%s4] sm:$0x1]
    %v778 = vlaneseq
    %v779 = vshrl.u32 %v778, 7
    %v780 = vsub.s32 0, %v779
    %v781 = vrot.slane %v776, %v780
    %v787 = vunpack.c.l.b16 %v772
    %v788 = vunpack.c.l.b16 %v773
    %v789 = vunpack.c.l.b16 %v774
    %v790 = vunpack.c.l.b16 %v775
    %v791 = vpack.c.b16 %v788, %v787
    %v792 = vpack.c.b16 %v790, %v789
    %v796 = vsel %vm45, %v771, 0
    %798 = vmatprep.subr.bf16.mxu0 0
    %799 = vmatpush1.bf16.msra.mxu0 %v791
    %800 = vmatprep.subr.bf16.mxu0 0
    %801 = vmatpush1.bf16.msra.mxu0 %v792
    %802 = vmatprep.subr.bf16.mxu0 0
    %803 = vmatpush1.bf16.msra.mxu0 0
    %804 = vmatprep.subr.bf16.mxu0 0
    %805 = vmatpush1.bf16.msra.mxu0 0
    %806 = vmatprep.subr.bf16.mxu0 0
    %807 = vmatpush1.bf16.msra.mxu0 0
    %808 = vmatprep.subr.bf16.mxu0 0
    %809 = vmatpush1.bf16.msra.mxu0 0
    %810 = vmatprep.subr.bf16.mxu0 0
    %811 = vmatpush1.bf16.msra.mxu0 0
    %812 = vmatprep.subr.bf16.mxu0 0
    %813 = vmatpush1.bf16.msra.mxu0 0
    %814 = vmatprep.subr.bf16.mxu0 0
    %815 = vmatpush1.bf16.msra.mxu0 0
    %816 = vmatprep.subr.bf16.mxu0 0
    %817 = vmatpush1.bf16.msra.mxu0 0
    %818 = vmatprep.subr.bf16.mxu0 0
    %819 = vmatpush1.bf16.msra.mxu0 0
    %820 = vmatprep.subr.bf16.mxu0 0
    %821 = vmatpush1.bf16.msra.mxu0 0
    %822 = vmatprep.subr.bf16.mxu0 0
    %823 = vmatpush1.bf16.msra.mxu0 0
    %824 = vmatprep.subr.bf16.mxu0 0
    %825 = vmatpush1.bf16.msra.mxu0 0
    %826 = vmatprep.subr.bf16.mxu0 0
    %827 = vmatpush1.bf16.msra.mxu0 0
    %828 = vmatprep.subr.bf16.mxu0 0
    %829 = vmatpush1.bf16.msra.mxu0 0
    %830 = vmatprep.mubr.bf16.mxu0 0
    %831 = vmatmul.mubr.bf16.gmra.mrb[0].mxu0 %v796
    %v832 = vpop.f32.mrb[0].mxu0
    %v833 = vadd.f32 %v781, %v832
    %v834 = vpop.f32.mrb[0].mxu0
    %v835 = vpop.f32.mrb[0].mxu0
    %v836 = vadd.f32 %v781, %v835
    %v837 = vpop.f32.mrb[0].mxu0
    %838 = vdwg.mxu0
    %839 = vst.msk [vmem:[#allocation2] sm:$0xff] %vm45, %v833
    %840 = vst.msk [vmem:[#allocation2 + $0x8] sm:$0xff] %vm45, %v836
    // Predicated region
    $region22: #{ragged_attention_forward.1} parent=1 // pred_check
      _
    $region23: #{ragged_attention_forward.1} parent=1 // pred_check_branch
      %842 = sbr.rel (0) target = $region25
    $region24: #{ragged_attention_forward.1} parent=1 // pred_region
      %s844 = ssub.s32 256, 256
      %845 = vsyncadd [#allocation3], %s844
      %s846 = sshll.u32 [#allocation2], 4
      %s847 = int_to_ptr.vmem [resolvable:$true] %s846
      %852 = dma.vmem_to_hbm [thread:$0]  %s847, 256, %s5, [#allocation3], 128, 128, 8
    $region25: #{ragged_attention_forward.1} parent=1 // pred_fallthru
      _
    // Predicated region
    $region26: #{ragged_attention_forward.1} parent=1 // pred_check
      _
    $region27: #{ragged_attention_forward.1} parent=1 // pred_check_branch
      %854 = sbr.rel (0) target = $region29
    $region28: #{ragged_attention_forward.1} parent=1 // pred_region
      %855 = dma.done [#allocation3], 256
    $region29: #{ragged_attention_forward.1} parent=1 // pred_fallthru
      _
    %856 = vsyncpa [#allocation3], 1

</llo_original>
